<compile_context>
chip_gen: v7x
topology: tpu7x:2x2x1
jax: 0.10.0
libtpu: 0.0.40
codegen_flags: <defaults>
</compile_context>

<pallas_src>
import jax
import jax.numpy as jnp
from jax.experimental import pallas as pl
from jax.experimental.pallas import tpu as pltpu


# ------------------------------- Pallas kernel ------------------------------ #

def _pointwise_conv_kernel(x_ref, w_ref, b_ref, o_ref):
    """1x1x1 conv tile.

    x_ref: (1, Cin, tile_S)   w_ref: (Cout, Cin)   b_ref: (Cout, 1)
    o_ref: (1, Cout, tile_S)  -- lane-dense output (tile_S on the 128-lane axis)
    """
    y = jnp.dot(w_ref[...], x_ref[0],
                preferred_element_type=jnp.float32)       # (Cout, tile_S) on MXU
    o_ref[0] = (y + b_ref[...]).astype(o_ref.dtype)


# --------------------------------- wrapper ---------------------------------- #

def _round_up(x, m):
    return (x + m - 1) // m * m


def out_block_forward(x_ncdhw, weight, bias, *, tile_s=1024):
    """OutBlock.forward: nn.Conv3d(in_channels, out_channels, kernel_size=1).

    x_ncdhw: (N, Cin, D, H, W)  weight: (Cout, Cin, 1, 1, 1)  bias: (Cout,)
    Returns (N, Cout, D, H, W) in the same (PyTorch) layout.
    """
    n, cin, d, h, w = x_ncdhw.shape
    cout = weight.shape[0]
    s = d * h * w

    x2 = x_ncdhw.reshape(n, cin, s)
    tile_s = min(tile_s, _round_up(s, 128))       # lane axis: multiple of 128
    s_pad = _round_up(s, tile_s)
    if s_pad != s:
        x2 = jnp.pad(x2, ((0, 0), (0, 0), (0, s_pad - s)))

    w2 = weight.reshape(cout, cin).astype(x2.dtype)
    b2 = bias.reshape(cout, 1).astype(jnp.float32)

    grid = (n, s_pad // tile_s)
    out = pl.pallas_call(
        _pointwise_conv_kernel,
        out_shape=jax.ShapeDtypeStruct((n, cout, s_pad), x_ncdhw.dtype),
        grid=grid,
        in_specs=[
            pl.BlockSpec((1, cin, tile_s), lambda b, j: (b, 0, j)),
            pl.BlockSpec((cout, cin), lambda b, j: (0, 0)),   # resident weights
            pl.BlockSpec((cout, 1), lambda b, j: (0, 0)),     # resident bias
        ],
        out_specs=pl.BlockSpec((1, cout, tile_s), lambda b, j: (b, 0, j)),
        compiler_params=pltpu.CompilerParams(
            dimension_semantics=("parallel", "parallel"),     # megacore on v7x
            vmem_limit_bytes=32 * 1024 * 1024,                # safe on 64MiB v7x
        ),
    )(x2, w2, b2)

    if s_pad != s:
        out = out[:, :, :s]
    return out.reshape(n, cout, d, h, w)


# ------------------------------ parameter init ------------------------------ #

def init_out_block_params(key, in_channels, out_channels):
    """Matches PyTorch Conv3d default init (uniform +/- 1/sqrt(fan_in))."""
    kw, kb = jax.random.split(key)
    bound = 1.0 / jnp.sqrt(float(in_channels))   # kernel_size=1 -> fan_in = Cin
    w = jax.random.uniform(kw, (out_channels, in_channels, 1, 1, 1),
                           jnp.float32, -bound, bound)
    b = jax.random.uniform(kb, (out_channels,), jnp.float32, -bound, bound)
    return w, b


# --------------------------- pure-JAX reference ------------------------------ #

def _ref_out_block(x, weight, bias):
    wmat = weight.reshape(weight.shape[0], weight.shape[1])   # (Cout, Cin)
    y = jnp.einsum('ncdhw,oc->nodhw', x, wmat)
    return y + bias.reshape(1, -1, 1, 1, 1)


# ----------------------------------- main ------------------------------------ #

if __name__ == "__main__":
    key = jax.random.PRNGKey(0)
    kx, kp = jax.random.split(key)

    # Small shapes consistent with a UNet final head: N=2, Cin=32, 16^3 volume,
    # Cout=4 segmentation classes.
    N, Cin, D, H, W = 2, 32, 16, 16, 16
    Cout = 4

    x = jax.random.normal(kx, (N, Cin, D, H, W), jnp.float32)
    weight, bias = init_out_block_params(kp, Cin, Cout)

    fwd = jax.jit(out_block_forward)
    out = fwd(x, weight, bias)
    jax.block_until_ready(out)

    # correctness vs pure-JAX reference
    out_ref = _ref_out_block(x, weight, bias)
    assert out.shape == (N, Cout, D, H, W)
    assert jnp.allclose(out, out_ref, atol=1e-4, rtol=1e-4)

    print("KERNEL_OK")
</pallas_src>

<mosaic_0001>
module attributes {stable_mosaic.version = 11 : i64} {
  func.func @_pointwise_conv_kernel(%arg0: i32, %arg1: i32, %arg2: memref<1x32x1024xf32, #tpu.memory_space<vmem>>, %arg3: memref<4x32xf32, #tpu.memory_space<vmem>>, %arg4: memref<4x1xf32, #tpu.memory_space<vmem>>, %arg5: memref<1x4x1024xf32, #tpu.memory_space<vmem>>) attributes {dimension_semantics = [#tpu.dimension_semantics<parallel>, #tpu.dimension_semantics<parallel>], iteration_bounds = array<i64: 2, 4>, scalar_prefetch = 0 : i64, scratch_operands = 0 : i64, tpu.core_type = #tpu.core_type<tc>, window_params = [{transform_indices = @transform_0, window_bounds = array<i64: 1, 32, 1024>}, {pipeline_mode = #tpu.pipeline_mode<synchronous>, transform_indices = @transform_1, window_bounds = array<i64: 4, 32>}, {pipeline_mode = #tpu.pipeline_mode<synchronous>, transform_indices = @transform_2, window_bounds = array<i64: 4, 1>}, {transform_indices = @transform_3, window_bounds = array<i64: 1, 4, 1024>}]} {
    %c0 = arith.constant 0 : index
    %c0_0 = arith.constant 0 : index
    %0 = vector.load %arg3[%c0, %c0_0] : memref<4x32xf32, #tpu.memory_space<vmem>>, vector<4x32xf32>
    %c0_1 = arith.constant 0 : index
    %c0_2 = arith.constant 0 : index
    %c0_3 = arith.constant 0 : index
    %1 = vector.load %arg2[%c0_1, %c0_2, %c0_3] : memref<1x32x1024xf32, #tpu.memory_space<vmem>>, vector<1x32x1024xf32>
    %2 = vector.shape_cast %1 : vector<1x32x1024xf32> to vector<32x1024xf32>
    %cst = arith.constant dense<0.000000e+00> : vector<4x1024xf32>
    %3 = tpu.matmul %0, %2, %cst {dimension_numbers = #tpu.dot_dimension_numbers<[1], [0], [0], [1], [0, 0, 1, 1], [], []>} : vector<4x32xf32>, vector<32x1024xf32>, vector<4x1024xf32> -> vector<4x1024xf32>
    %c0_4 = arith.constant 0 : index
    %c0_5 = arith.constant 0 : index
    %4 = vector.load %arg4[%c0_4, %c0_5] : memref<4x1xf32, #tpu.memory_space<vmem>>, vector<4x1xf32>
    %5 = vector.broadcast %4 : vector<4x1xf32> to vector<4x1024xf32>
    %6 = arith.addf %3, %5 : vector<4x1024xf32>
    %c0_6 = arith.constant 0 : index
    %c0_7 = arith.constant 0 : index
    %c0_8 = arith.constant 0 : index
    %7 = vector.load %arg5[%c0_6, %c0_7, %c0_8] : memref<1x4x1024xf32, #tpu.memory_space<vmem>>, vector<1x4x1024xf32>
    %8 = vector.shape_cast %7 : vector<1x4x1024xf32> to vector<4x1024xf32>
    %9 = vector.shape_cast %6 : vector<4x1024xf32> to vector<1x4x1024xf32>
    tpu.vector_store %arg5[%c0_6, %c0_7, %c0_8], %9 {strides = array<i32>} : memref<1x4x1024xf32, #tpu.memory_space<vmem>>, vector<1x4x1024xf32>,
    return
  }
  func.func @transform_0(%arg0: i32, %arg1: i32) -> (i32, i32, i32) {
    %c0_i32 = arith.constant 0 : i32
    %c0_i32_0 = arith.constant 0 : i32
    return %arg0, %c0_i32, %arg1 : i32, i32, i32
  }
  func.func @transform_1(%arg0: i32, %arg1: i32) -> (i32, i32) {
    %c0_i32 = arith.constant 0 : i32
    %c0_i32_0 = arith.constant 0 : i32
    %c0_i32_1 = arith.constant 0 : i32
    return %c0_i32, %c0_i32_0 : i32, i32
  }
  func.func @transform_2(%arg0: i32, %arg1: i32) -> (i32, i32) {
    %c0_i32 = arith.constant 0 : i32
    %c0_i32_0 = arith.constant 0 : i32
    %c0_i32_1 = arith.constant 0 : i32
    return %c0_i32, %c0_i32_0 : i32, i32
  }
  func.func @transform_3(%arg0: i32, %arg1: i32) -> (i32, i32, i32) {
    %c0_i32 = arith.constant 0 : i32
    %c0_i32_0 = arith.constant 0 : i32
    return %arg0, %c0_i32, %arg1 : i32, i32, i32
  }
}

</mosaic_0001>

<llo_original>
// kernel: out_block_forward.1
$region0: #{out_block_forward.1}
  #allocation0 [shape = 'u32[]', space=smem, size = 0x4, offset = 0x4, fixed_abs, tag = 'smem constant byte address 0x4 - core index']
  #allocation1 [shape = 'u32[144,128]{1,0:T(1,128)}', space=vmem, size = 0x12000, scoped, tag = 'internal scratch']
  %s0 = inlined_call_operand.vmem [shape: f32[2,32,4096], index: 0, kind: input, shape index: {}]
  %s1 = inlined_call_operand.vmem [shape: f32[4,32], index: 1, kind: input, shape index: {}]
  %s2 = inlined_call_operand.vmem [shape: f32[4,1], index: 2, kind: input, shape index: {}]
  %s3 = inlined_call_operand.vmem [shape: f32[2,4,4096], index: 3, kind: output, shape index: {}]
  %s4 = sld [smem:[#allocation0]]
  $region68: #{out_block_forward.1} parent=0
    _
  %s6 = ssub.s32 1, %s4
  %s7 = scalar_select 0, %s6, %s4
  $region1: #{out_block_forward.1} parent=0
    #allocation2 [shape = 'u8[262144]{0}', space=vmem, size = 0x40000, scoped, tag = 'input window, operand 0']
    loop: start=0, step=1, limit=10
    $region2: #{out_block_forward.1} parent=1 // loop_pre_header
      _
    $region3: #{out_block_forward.1} parent=1 // loop_header
      %s9 = sphi 0, %s13
      %p10 = scmp.ge.s32.totalorder %s9, 10
      %s16 = sphi 0, %s28
      %s17 = sphi 0, %s24
      %s18 = sphi 0, %s16
      %s19 = sphi 0, %s17
      %s20 = sphi 0, %s18
      %s21 = sphi 0, %s19
      %s33 = sphi 0, %s35
      %s36 = sphi 0, %s33
      %s37 = sphi 0, %s36
      %s53 = sphi 0, %s37
      %s57 = sphi 0, %s57
      %s59 = sphi 0, %s57
      %s60 = sphi 0, %s59
      %s74 = sphi 0, %s60
      %s78 = sphi 0, %s78
      %s80 = sphi 0, %s78
      %s81 = sphi 0, %s80
      %s95 = sphi 0, %s81
      %s103 = sphi 0, %s105
      %s106 = sphi 0, %s103
      %s107 = sphi 0, %s106
      %s123 = sphi 0, %s107
    $region4: #{out_block_forward.1} parent=1 // loop_header_branch
      %12 = sbr.rel (%p10) target = $region8
    $region5: #{out_block_forward.1} parent=1 // loop_body
      %s14 = ssub.s32 %s9, 1
      %s15 = ssub.s32 %s9, 2
      %s22 = sadd.s32 1, %s17
      %p23 = scmp.ge.s32.totalorder %s22, 4
      %s24 = scalar_select %p23, 0, %s22
      %s25 = sadd.s32 1, %s16
      %s26 = scalar_select %p23, %s25, %s16
      %p27 = scmp.ge.s32.totalorder %s26, 2
      %s28 = scalar_select %p27, 0, %s26
      %s29 = ssub.s32 %s16, %s28
      %s30 = ssub.s32 %s17, %s24
      %s31 = sor.u32 %s29, %s30
      %p32 = scmp.eq.s32.totalorder %s31, 0
      %s34 = sadd.s32 %s33, 1
      %s35 = scalar_select %p32, %s33, %s34
      %p38 = pneg %p32
      %p39 = scmp.eq.s32.totalorder %s9, 7
      %p40 = por %p38, %p39
      %p41 = scmp.ne.s32.totalorder %s33, %s36
      %p42 = scmp.eq.s32.totalorder %s9, 0
      %p43 = por %p41, %p42
      %p44 = scmp.ne.s32.totalorder %s33, %s36
      %p45 = scmp.eq.s32.totalorder %s14, 7
      %p46 = por %p44, %p45
      %p47 = scmp.ne.s32.totalorder %s36, %s37
      %p48 = scmp.eq.s32.totalorder %s14, 0
      %p49 = por %p47, %p48
      %p50 = scmp.ne.s32.totalorder %s36, %s37
      %p51 = scmp.eq.s32.totalorder %s15, 7
      %p52 = por %p50, %p51
      %p54 = scmp.ne.s32.totalorder %s37, %s53
      %p55 = scmp.eq.s32.totalorder %s15, 0
      %p56 = por %p54, %p55
      %s58 = sadd.s32 %s57, 1
      %p61 = scmp.eq.s32.totalorder %s9, 7
      %p62 = scmp.ne.s32.totalorder %s57, %s59
      %p63 = scmp.eq.s32.totalorder %s9, 0
      %p64 = por %p62, %p63
      %p65 = scmp.ne.s32.totalorder %s57, %s59
      %p66 = scmp.eq.s32.totalorder %s14, 7
      %p67 = por %p65, %p66
      %p68 = scmp.ne.s32.totalorder %s59, %s60
      %p69 = scmp.eq.s32.totalorder %s14, 0
      %p70 = por %p68, %p69
      %p71 = scmp.ne.s32.totalorder %s59, %s60
      %p72 = scmp.eq.s32.totalorder %s15, 7
      %p73 = por %p71, %p72
      %p75 = scmp.ne.s32.totalorder %s60, %s74
      %p76 = scmp.eq.s32.totalorder %s15, 0
      %p77 = por %p75, %p76
      %s79 = sadd.s32 %s78, 1
      %p82 = scmp.eq.s32.totalorder %s9, 7
      %p83 = scmp.ne.s32.totalorder %s78, %s80
      %p84 = scmp.eq.s32.totalorder %s9, 0
      %p85 = por %p83, %p84
      %p86 = scmp.ne.s32.totalorder %s78, %s80
      %p87 = scmp.eq.s32.totalorder %s14, 7
      %p88 = por %p86, %p87
      %p89 = scmp.ne.s32.totalorder %s80, %s81
      %p90 = scmp.eq.s32.totalorder %s14, 0
      %p91 = por %p89, %p90
      %p92 = scmp.ne.s32.totalorder %s80, %s81
      %p93 = scmp.eq.s32.totalorder %s15, 7
      %p94 = por %p92, %p93
      %p96 = scmp.ne.s32.totalorder %s81, %s95
      %p97 = scmp.eq.s32.totalorder %s15, 0
      %p98 = por %p96, %p97
      %s99 = ssub.s32 %s16, %s28
      %s100 = ssub.s32 %s17, %s24
      %s101 = sor.u32 %s99, %s100
      %p102 = scmp.eq.s32.totalorder %s101, 0
      %s104 = sadd.s32 %s103, 1
      %s105 = scalar_select %p102, %s103, %s104
      %p108 = pneg %p102
      %p109 = scmp.eq.s32.totalorder %s9, 7
      %p110 = por %p108, %p109
      %p111 = scmp.ne.s32.totalorder %s103, %s106
      %p112 = scmp.eq.s32.totalorder %s9, 0
      %p113 = por %p111, %p112
      %p114 = scmp.ne.s32.totalorder %s103, %s106
      %p115 = scmp.eq.s32.totalorder %s14, 7
      %p116 = por %p114, %p115
      %p117 = scmp.ne.s32.totalorder %s106, %s107
      %p118 = scmp.eq.s32.totalorder %s14, 0
      %p119 = por %p117, %p118
      %p120 = scmp.ne.s32.totalorder %s106, %s107
      %p121 = scmp.eq.s32.totalorder %s15, 7
      %p122 = por %p120, %p121
      %p124 = scmp.ne.s32.totalorder %s107, %s123
      %p125 = scmp.eq.s32.totalorder %s15, 0
      %p126 = por %p124, %p125
      %p127 = scmp.le.s32.totalorder 1, %s9
      %p128 = scmp.lt.s32.totalorder %s9, 9
      %p129 = pnand %p127, %p128
      %p130 = pneg %p129
      // Predicated region
      $region9: #{out_block_forward.1} parent=5 // pred_check
        _
      $region10: #{out_block_forward.1} parent=5 // pred_check_branch
        %132 = sbr.rel (%p129) target = $region12
      $region11: #{out_block_forward.1} parent=5 // pred_region
        %s133 = ssub.s32 %s9, 1
        // Predicated region
        $region13: #{out_block_forward.1} parent=11 // pred_check
          %p134 = pneg %p70
        $region14: #{out_block_forward.1} parent=11 // pred_check_branch
          %136 = sbr.rel (%p134) target = $region16
        $region15: #{out_block_forward.1} parent=11 // pred_region
          _
        $region16: #{out_block_forward.1} parent=11 // pred_fallthru
          _
        // Predicated region
        $region17: #{out_block_forward.1} parent=11 // pred_check
          %p137 = pneg %p91
        $region18: #{out_block_forward.1} parent=11 // pred_check_branch
          %139 = sbr.rel (%p137) target = $region20
        $region19: #{out_block_forward.1} parent=11 // pred_region
          _
        $region20: #{out_block_forward.1} parent=11 // pred_fallthru
          _
      $region12: #{out_block_forward.1} parent=5 // pred_fallthru
        _
      %p140 = scmp.lt.s32.totalorder %s9, 8
      // Predicated region
      $region21: #{out_block_forward.1} parent=5 // pred_check
        %p141 = pneg %p140
      $region22: #{out_block_forward.1} parent=5 // pred_check_branch
        %143 = sbr.rel (%p141) target = $region24
      $region23: #{out_block_forward.1} parent=5 // pred_region
        // Predicated region
        $region25: #{out_block_forward.1} parent=23 // pred_check
          %p144 = pneg %p43
        $region26: #{out_block_forward.1} parent=23 // pred_check_branch
          %146 = sbr.rel (%p144) target = $region28
        $region27: #{out_block_forward.1} parent=23 // pred_region
          %s147 = sand.u32 %s33, 1
          %s148 = sand.u32 %s33, 1
          %s149 = smul.addr %s148, 256
          %s150 = scalar_lea.vmem [#allocation2], %s149
          %s151 = smul.u32 8, %s17
          %s152 = smul.addr %s16, 128
          %s153 = sadd.s32 %s151, %s152
          %s154 = smul.addr %s153, 8
          %s155 = scalar_lea.vmem %s0, %s154
          // Predicated region
          $region29: #{out_block_forward.1} parent=27 // pred_check
            _
          $region30: #{out_block_forward.1} parent=27 // pred_check_branch
            %157 = sbr.rel (0) target = $region32
          $region31: #{out_block_forward.1} parent=27 // pred_region
            // Predicated region
            $region33: #{out_block_forward.1} parent=31 // pred_check
              _
            $region34: #{out_block_forward.1} parent=31 // pred_check_branch
              %159 = sbr.rel (0) target = $region36
            $region35: #{out_block_forward.1} parent=31 // pred_region
              loop: start=0, step=1, limit=1
              $region37: #{out_block_forward.1} parent=35 // loop_pre_header
                _
              $region38: #{out_block_forward.1} parent=35 // loop_header
                %s161 = sphi 0, %s165
                %p162 = scmp.ge.s32.totalorder %s161, 1
                %s166 = sphi %s155, %s155
                %s167 = sphi %s150, %s150
              $region39: #{out_block_forward.1} parent=35 // loop_header_branch
                %164 = sbr.rel (%p162) target = $region43
              $region40: #{out_block_forward.1} parent=35 // loop_body
                %v168 = vld [vmem:[%s166] sm:$0xff]
                %169 = vst [vmem:[%s167] sm:$0xff] %v168
                %v170 = vld [vmem:[%s166 + $0x8] sm:$0xff]
                %171 = vst [vmem:[%s167 + $0x8] sm:$0xff] %v170
                %v172 = vld [vmem:[%s166 + $0x10] sm:$0xff]
                %173 = vst [vmem:[%s167 + $0x10] sm:$0xff] %v172
                %v174 = vld [vmem:[%s166 + $0x18] sm:$0xff]
                %175 = vst [vmem:[%s167 + $0x18] sm:$0xff] %v174
                %v176 = vld [vmem:[%s166 + $0x20] sm:$0xff]
                %177 = vst [vmem:[%s167 + $0x20] sm:$0xff] %v176
                %v178 = vld [vmem:[%s166 + $0x28] sm:$0xff]
                %179 = vst [vmem:[%s167 + $0x28] sm:$0xff] %v178
                %v180 = vld [vmem:[%s166 + $0x30] sm:$0xff]
                %181 = vst [vmem:[%s167 + $0x30] sm:$0xff] %v180
                %v182 = vld [vmem:[%s166 + $0x38] sm:$0xff]
                %183 = vst [vmem:[%s167 + $0x38] sm:$0xff] %v182
                %v184 = vld [vmem:[%s166 + $0x100] sm:$0xff]
                %185 = vst [vmem:[%s167 + $0x40] sm:$0xff] %v184
                %v186 = vld [vmem:[%s166 + $0x108] sm:$0xff]
                %187 = vst [vmem:[%s167 + $0x48] sm:$0xff] %v186
                %v188 = vld [vmem:[%s166 + $0x110] sm:$0xff]
                %189 = vst [vmem:[%s167 + $0x50] sm:$0xff] %v188
                %v190 = vld [vmem:[%s166 + $0x118] sm:$0xff]
                %191 = vst [vmem:[%s167 + $0x58] sm:$0xff] %v190
                %v192 = vld [vmem:[%s166 + $0x120] sm:$0xff]
                %193 = vst [vmem:[%s167 + $0x60] sm:$0xff] %v192
                %v194 = vld [vmem:[%s166 + $0x128] sm:$0xff]
                %195 = vst [vmem:[%s167 + $0x68] sm:$0xff] %v194
                %v196 = vld [vmem:[%s166 + $0x130] sm:$0xff]
                %197 = vst [vmem:[%s167 + $0x70] sm:$0xff] %v196
                %v198 = vld [vmem:[%s166 + $0x138] sm:$0xff]
                %199 = vst [vmem:[%s167 + $0x78] sm:$0xff] %v198
                %v200 = vld [vmem:[%s166 + $0x200] sm:$0xff]
                %201 = vst [vmem:[%s167 + $0x80] sm:$0xff] %v200
                %v202 = vld [vmem:[%s166 + $0x208] sm:$0xff]
                %203 = vst [vmem:[%s167 + $0x88] sm:$0xff] %v202
                %v204 = vld [vmem:[%s166 + $0x210] sm:$0xff]
                %205 = vst [vmem:[%s167 + $0x90] sm:$0xff] %v204
                %v206 = vld [vmem:[%s166 + $0x218] sm:$0xff]
                %207 = vst [vmem:[%s167 + $0x98] sm:$0xff] %v206
                %v208 = vld [vmem:[%s166 + $0x220] sm:$0xff]
                %209 = vst [vmem:[%s167 + $0xa0] sm:$0xff] %v208
                %v210 = vld [vmem:[%s166 + $0x228] sm:$0xff]
                %211 = vst [vmem:[%s167 + $0xa8] sm:$0xff] %v210
                %v212 = vld [vmem:[%s166 + $0x230] sm:$0xff]
                %213 = vst [vmem:[%s167 + $0xb0] sm:$0xff] %v212
                %v214 = vld [vmem:[%s166 + $0x238] sm:$0xff]
                %215 = vst [vmem:[%s167 + $0xb8] sm:$0xff] %v214
                %v216 = vld [vmem:[%s166 + $0x300] sm:$0xff]
                %217 = vst [vmem:[%s167 + $0xc0] sm:$0xff] %v216
                %v218 = vld [vmem:[%s166 + $0x308] sm:$0xff]
                %219 = vst [vmem:[%s167 + $0xc8] sm:$0xff] %v218
                %v220 = vld [vmem:[%s166 + $0x310] sm:$0xff]
                %221 = vst [vmem:[%s167 + $0xd0] sm:$0xff] %v220
                %v222 = vld [vmem:[%s166 + $0x318] sm:$0xff]
                %223 = vst [vmem:[%s167 + $0xd8] sm:$0xff] %v222
                %v224 = vld [vmem:[%s166 + $0x320] sm:$0xff]
                %225 = vst [vmem:[%s167 + $0xe0] sm:$0xff] %v224
                %v226 = vld [vmem:[%s166 + $0x328] sm:$0xff]
                %227 = vst [vmem:[%s167 + $0xe8] sm:$0xff] %v226
                %v228 = vld [vmem:[%s166 + $0x330] sm:$0xff]
                %229 = vst [vmem:[%s167 + $0xf0] sm:$0xff] %v228
                %v230 = vld [vmem:[%s166 + $0x338] sm:$0xff]
                %231 = vst [vmem:[%s167 + $0xf8] sm:$0xff] %v230
              $region41: #{out_block_forward.1} parent=35 // loop_footer
                %s165 = sadd.s32 1, %s161
              $region42: #{out_block_forward.1} parent=35 // loop_footer_branch
                %160 = sbr.rel target = $region38
              $region43: #{out_block_forward.1} parent=35 // loop_exit
                _
            $region36: #{out_block_forward.1} parent=31 // pred_fallthru
              _
            // Predicated region
            $region44: #{out_block_forward.1} parent=31 // pred_check
              _
            $region45: #{out_block_forward.1} parent=31 // pred_check_branch
              %233 = sbr.rel target = $region47
            $region46: #{out_block_forward.1} parent=31 // pred_region
              _
            $region47: #{out_block_forward.1} parent=31 // pred_fallthru
              _
          $region32: #{out_block_forward.1} parent=27 // pred_fallthru
            _
          %234 = vnop
        $region28: #{out_block_forward.1} parent=23 // pred_fallthru
          _
      $region24: #{out_block_forward.1} parent=5 // pred_fallthru
        _
      %p235 = scmp.le.s32.totalorder 1, %s9
      %p236 = scmp.lt.s32.totalorder %s9, 9
      %p237 = pnand %p235, %p236
      %p238 = pneg %p237
      // Predicated region
      $region48: #{out_block_forward.1} parent=5 // pred_check
        _
      $region49: #{out_block_forward.1} parent=5 // pred_check_branch
        %240 = sbr.rel (%p237) target = $region51
      $region50: #{out_block_forward.1} parent=5 // pred_region
        %s241 = ssub.s32 %s9, 1
        %s242 = sand.u32 %s36, 1
        %s243 = sand.u32 %s36, 1
        %s244 = smul.addr %s243, 256
        %s245 = scalar_lea.vmem [#allocation2], %s244
        // Predicated region
        $region52: #{out_block_forward.1} parent=50 // pred_check
          %p246 = pneg %p49
        $region53: #{out_block_forward.1} parent=50 // pred_check_branch
          %248 = sbr.rel (%p246) target = $region55
        $region54: #{out_block_forward.1} parent=50 // pred_region
          _
        $region55: #{out_block_forward.1} parent=50 // pred_fallthru
          _
        %s249 = sand.u32 %s36, 1
        %s250 = sand.u32 %s36, 1
        %s251 = smul.addr %s250, 256
        %s252 = scalar_lea.vmem [#allocation2], %s251
        %p253 = pneg %p49
        %p254 = pneg %p46
        %p255 = pneg %p70
        %p256 = pneg %p67
        %p257 = pneg %p91
        %p258 = pneg %p88
        %p259 = pneg %p119
        %p260 = pneg %p116
        %s261 = smul.u32 8, %s19
        %p262 = scmp.lt.s32.totalorder %s18, 1
        %s263 = scalar_select %p262, %s18, 1
        %p264 = scmp.lt.s32.totalorder %s261, 31
        %s265 = scalar_select %p264, %s261, 31
        %s266 = smul.addr %s263, 32
        %s267 = sadd.s32 %s265, %s266
        %s268 = smul.addr %s267, 4
        %s269 = scalar_lea.vmem %s3, %s268
        %s270 = smul.u32 8, %s19
        %s271 = smul.u32 8, %s19
        %p272 = scmp.lt.s32.totalorder %s18, 1
        %s273 = scalar_select %p272, %s18, 1
        %p274 = scmp.lt.s32.totalorder %s271, 31
        %s275 = scalar_select %p274, %s271, 31
        %s276 = smul.addr %s273, 32
        %s277 = sadd.s32 %s275, %s276
        %s278 = smul.addr %s277, 4
        %s279 = scalar_lea.vmem %s3, %s278
        %s280 = smul.u32 8, %s19
        %v281 = vld [vmem:[%s1] sm:$0xf]
        %v282 = vld [vmem:[%s245] sm:$0xff]
        %v283 = vld [vmem:[%s245 + $0x8] sm:$0xff]
        %v284 = vld [vmem:[%s245 + $0x10] sm:$0xff]
        %v285 = vld [vmem:[%s245 + $0x18] sm:$0xff]
        %v286 = vld [vmem:[%s245 + $0x20] sm:$0xff]
        %v287 = vld [vmem:[%s245 + $0x28] sm:$0xff]
        %v288 = vld [vmem:[%s245 + $0x30] sm:$0xff]
        %v289 = vld [vmem:[%s245 + $0x38] sm:$0xff]
        %v290 = vld [vmem:[%s245 + $0x40] sm:$0xff]
        %v291 = vld [vmem:[%s245 + $0x48] sm:$0xff]
        %v292 = vld [vmem:[%s245 + $0x50] sm:$0xff]
        %v293 = vld [vmem:[%s245 + $0x58] sm:$0xff]
        %v294 = vld [vmem:[%s245 + $0x60] sm:$0xff]
        %v295 = vld [vmem:[%s245 + $0x68] sm:$0xff]
        %v296 = vld [vmem:[%s245 + $0x70] sm:$0xff]
        %v297 = vld [vmem:[%s245 + $0x78] sm:$0xff]
        %v298 = vld [vmem:[%s245 + $0x80] sm:$0xff]
        %v299 = vld [vmem:[%s245 + $0x88] sm:$0xff]
        %v300 = vld [vmem:[%s245 + $0x90] sm:$0xff]
        %v301 = vld [vmem:[%s245 + $0x98] sm:$0xff]
        %v302 = vld [vmem:[%s245 + $0xa0] sm:$0xff]
        %v303 = vld [vmem:[%s245 + $0xa8] sm:$0xff]
        %v304 = vld [vmem:[%s245 + $0xb0] sm:$0xff]
        %v305 = vld [vmem:[%s245 + $0xb8] sm:$0xff]
        %v306 = vld [vmem:[%s245 + $0xc0] sm:$0xff]
        %v307 = vld [vmem:[%s245 + $0xc8] sm:$0xff]
        %v308 = vld [vmem:[%s245 + $0xd0] sm:$0xff]
        %v309 = vld [vmem:[%s245 + $0xd8] sm:$0xff]
        %v310 = vld [vmem:[%s245 + $0xe0] sm:$0xff]
        %v311 = vld [vmem:[%s245 + $0xe8] sm:$0xff]
        %v312 = vld [vmem:[%s245 + $0xf0] sm:$0xff]
        %v313 = vld [vmem:[%s245 + $0xf8] sm:$0xff]
        %v314 = vld [vmem:[%s2] sm:$0xf]
        %316 = vset.pattern.permute.xlu0 0
        %317 = vperm.xlu0 %316, %v314
        %v318 = vpop.permute.xlu0 %317
        %vm320 = vcmask 261120
        %v322 = vsel %vm320, %v281, 0
        %324 = vmatprep.subr.mxu0 %v283
        %325 = vmatpush1.msra.mxu0 %v282
        %326 = vmatprep.subr.mxu0 %v291
        %327 = vmatpush1.msra.mxu0 %v290
        %328 = vmatprep.subr.mxu0 %v299
        %329 = vmatpush1.msra.mxu0 %v298
        %330 = vmatprep.subr.mxu0 %v307
        %331 = vmatpush1.msra.mxu0 %v306
        %332 = vmatprep.subr.mxu0 0.0
        %333 = vmatpush1.msra.mxu0 0.0
        %334 = vmatprep.subr.mxu0 0.0
        %335 = vmatpush1.msra.mxu0 0.0
        %336 = vmatprep.subr.mxu0 0.0
        %337 = vmatpush1.msra.mxu0 0.0
        %338 = vmatprep.subr.mxu0 0.0
        %339 = vmatpush1.msra.mxu0 0.0
        %340 = vmatprep.subr.mxu0 0.0
        %341 = vmatpush1.msra.mxu0 0.0
        %342 = vmatprep.subr.mxu0 0.0
        %343 = vmatpush1.msra.mxu0 0.0
        %344 = vmatprep.subr.mxu0 0.0
        %345 = vmatpush1.msra.mxu0 0.0
        %346 = vmatprep.subr.mxu0 0.0
        %347 = vmatpush1.msra.mxu0 0.0
        %348 = vmatprep.subr.mxu0 0.0
        %349 = vmatpush1.msra.mxu0 0.0
        %350 = vmatprep.subr.mxu0 0.0
        %351 = vmatpush1.msra.mxu0 0.0
        %352 = vmatprep.subr.mxu0 0.0
        %353 = vmatpush1.msra.mxu0 0.0
        %354 = vmatprep.subr.mxu0 0.0
        %355 = vmatpush1.msra.mxu0 0.0
        %356 = vmatprep.subr.mxu0 0.0
        %357 = vmatpush1.msra.mxu0 0.0
        %358 = vmatprep.subr.mxu0 0.0
        %359 = vmatpush1.msra.mxu0 0.0
        %360 = vmatprep.subr.mxu0 0.0
        %361 = vmatpush1.msra.mxu0 0.0
        %362 = vmatprep.subr.mxu0 0.0
        %363 = vmatpush1.msra.mxu0 0.0
        %364 = vmatprep.subr.mxu0 0.0
        %365 = vmatpush1.msra.mxu0 0.0
        %366 = vmatprep.subr.mxu0 0.0
        %367 = vmatpush1.msra.mxu0 0.0
        %368 = vmatprep.subr.mxu0 0.0
        %369 = vmatpush1.msra.mxu0 0.0
        %370 = vmatprep.subr.mxu0 0.0
        %371 = vmatpush1.msra.mxu0 0.0
        %372 = vmatprep.subr.mxu0 0.0
        %373 = vmatpush1.msra.mxu0 0.0
        %374 = vmatprep.subr.mxu0 0.0
        %375 = vmatpush1.msra.mxu0 0.0
        %376 = vmatprep.subr.mxu0 0.0
        %377 = vmatpush1.msra.mxu0 0.0
        %378 = vmatprep.subr.mxu0 0.0
        %379 = vmatpush1.msra.mxu0 0.0
        %380 = vmatprep.subr.mxu0 0.0
        %381 = vmatpush1.msra.mxu0 0.0
        %382 = vmatprep.subr.mxu0 0.0
        %383 = vmatpush1.msra.mxu0 0.0
        %384 = vmatprep.subr.mxu0 0.0
        %385 = vmatpush1.msra.mxu0 0.0
        %386 = vmatprep.subr.mxu0 0.0
        %387 = vmatpush1.msra.mxu0 0.0
        %388 = vmatprep.mubr.f32.mxu0 0.0
        %389 = vmatmul.mubr.f32.gmra.mrb[0].mxu0 %v322
        %v390 = vpop.f32.mrb[0].mxu0
        %v391 = vadd.f32 %v318, %v390
        %v392 = vpop.f32.mrb[0].mxu0
        %v393 = vadd.f32 %v318, %v392
        %394 = vdwg.mxu0
        %395 = vmatprep.subr.mxu0 %v285
        %396 = vmatpush1.msra.mxu0 %v284
        %397 = vmatprep.subr.mxu0 %v293
        %398 = vmatpush1.msra.mxu0 %v292
        %399 = vmatprep.subr.mxu0 %v301
        %400 = vmatpush1.msra.mxu0 %v300
        %401 = vmatprep.subr.mxu0 %v309
        %402 = vmatpush1.msra.mxu0 %v308
        %403 = vmatprep.subr.mxu0 0.0
        %404 = vmatpush1.msra.mxu0 0.0
        %405 = vmatprep.subr.mxu0 0.0
        %406 = vmatpush1.msra.mxu0 0.0
        %407 = vmatprep.subr.mxu0 0.0
        %408 = vmatpush1.msra.mxu0 0.0
        %409 = vmatprep.subr.mxu0 0.0
        %410 = vmatpush1.msra.mxu0 0.0
        %411 = vmatprep.subr.mxu0 0.0
        %412 = vmatpush1.msra.mxu0 0.0
        %413 = vmatprep.subr.mxu0 0.0
        %414 = vmatpush1.msra.mxu0 0.0
        %415 = vmatprep.subr.mxu0 0.0
        %416 = vmatpush1.msra.mxu0 0.0
        %417 = vmatprep.subr.mxu0 0.0
        %418 = vmatpush1.msra.mxu0 0.0
        %419 = vmatprep.subr.mxu0 0.0
        %420 = vmatpush1.msra.mxu0 0.0
        %421 = vmatprep.subr.mxu0 0.0
        %422 = vmatpush1.msra.mxu0 0.0
        %423 = vmatprep.subr.mxu0 0.0
        %424 = vmatpush1.msra.mxu0 0.0
        %425 = vmatprep.subr.mxu0 0.0
        %426 = vmatpush1.msra.mxu0 0.0
        %427 = vmatprep.subr.mxu0 0.0
        %428 = vmatpush1.msra.mxu0 0.0
        %429 = vmatprep.subr.mxu0 0.0
        %430 = vmatpush1.msra.mxu0 0.0
        %431 = vmatprep.subr.mxu0 0.0
        %432 = vmatpush1.msra.mxu0 0.0
        %433 = vmatprep.subr.mxu0 0.0
        %434 = vmatpush1.msra.mxu0 0.0
        %435 = vmatprep.subr.mxu0 0.0
        %436 = vmatpush1.msra.mxu0 0.0
        %437 = vmatprep.subr.mxu0 0.0
        %438 = vmatpush1.msra.mxu0 0.0
        %439 = vmatprep.subr.mxu0 0.0
        %440 = vmatpush1.msra.mxu0 0.0
        %441 = vmatprep.subr.mxu0 0.0
        %442 = vmatpush1.msra.mxu0 0.0
        %443 = vmatprep.subr.mxu0 0.0
        %444 = vmatpush1.msra.mxu0 0.0
        %445 = vmatprep.subr.mxu0 0.0
        %446 = vmatpush1.msra.mxu0 0.0
        %447 = vmatprep.subr.mxu0 0.0
        %448 = vmatpush1.msra.mxu0 0.0
        %449 = vmatprep.subr.mxu0 0.0
        %450 = vmatpush1.msra.mxu0 0.0
        %451 = vmatprep.subr.mxu0 0.0
        %452 = vmatpush1.msra.mxu0 0.0
        %453 = vmatprep.subr.mxu0 0.0
        %454 = vmatpush1.msra.mxu0 0.0
        %455 = vmatprep.subr.mxu0 0.0
        %456 = vmatpush1.msra.mxu0 0.0
        %457 = vmatprep.subr.mxu0 0.0
        %458 = vmatpush1.msra.mxu0 0.0
        %459 = vmatprep.mubr.f32.mxu0 0.0
        %460 = vmatmul.mubr.f32.gmra.mrb[0].mxu0 %v322
        %v461 = vpop.f32.mrb[0].mxu0
        %v462 = vadd.f32 %v318, %v461
        %v463 = vpop.f32.mrb[0].mxu0
        %v464 = vadd.f32 %v318, %v463
        %465 = vdwg.mxu0
        %466 = vmatprep.subr.mxu0 %v287
        %467 = vmatpush1.msra.mxu0 %v286
        %468 = vmatprep.subr.mxu0 %v295
        %469 = vmatpush1.msra.mxu0 %v294
        %470 = vmatprep.subr.mxu0 %v303
        %471 = vmatpush1.msra.mxu0 %v302
        %472 = vmatprep.subr.mxu0 %v311
        %473 = vmatpush1.msra.mxu0 %v310
        %474 = vmatprep.subr.mxu0 0.0
        %475 = vmatpush1.msra.mxu0 0.0
        %476 = vmatprep.subr.mxu0 0.0
        %477 = vmatpush1.msra.mxu0 0.0
        %478 = vmatprep.subr.mxu0 0.0
        %479 = vmatpush1.msra.mxu0 0.0
        %480 = vmatprep.subr.mxu0 0.0
        %481 = vmatpush1.msra.mxu0 0.0
        %482 = vmatprep.subr.mxu0 0.0
        %483 = vmatpush1.msra.mxu0 0.0
        %484 = vmatprep.subr.mxu0 0.0
        %485 = vmatpush1.msra.mxu0 0.0
        %486 = vmatprep.subr.mxu0 0.0
        %487 = vmatpush1.msra.mxu0 0.0
        %488 = vmatprep.subr.mxu0 0.0
        %489 = vmatpush1.msra.mxu0 0.0
        %490 = vmatprep.subr.mxu0 0.0
        %491 = vmatpush1.msra.mxu0 0.0
        %492 = vmatprep.subr.mxu0 0.0
        %493 = vmatpush1.msra.mxu0 0.0
        %494 = vmatprep.subr.mxu0 0.0
        %495 = vmatpush1.msra.mxu0 0.0
        %496 = vmatprep.subr.mxu0 0.0
        %497 = vmatpush1.msra.mxu0 0.0
        %498 = vmatprep.subr.mxu0 0.0
        %499 = vmatpush1.msra.mxu0 0.0
        %500 = vmatprep.subr.mxu0 0.0
        %501 = vmatpush1.msra.mxu0 0.0
        %502 = vmatprep.subr.mxu0 0.0
        %503 = vmatpush1.msra.mxu0 0.0
        %504 = vmatprep.subr.mxu0 0.0
        %505 = vmatpush1.msra.mxu0 0.0
        %506 = vmatprep.subr.mxu0 0.0
        %507 = vmatpush1.msra.mxu0 0.0
        %508 = vmatprep.subr.mxu0 0.0
        %509 = vmatpush1.msra.mxu0 0.0
        %510 = vmatprep.subr.mxu0 0.0
        %511 = vmatpush1.msra.mxu0 0.0
        %512 = vmatprep.subr.mxu0 0.0
        %513 = vmatpush1.msra.mxu0 0.0
        %514 = vmatprep.subr.mxu0 0.0
        %515 = vmatpush1.msra.mxu0 0.0
        %516 = vmatprep.subr.mxu0 0.0
        %517 = vmatpush1.msra.mxu0 0.0
        %518 = vmatprep.subr.mxu0 0.0
        %519 = vmatpush1.msra.mxu0 0.0
        %520 = vmatprep.subr.mxu0 0.0
        %521 = vmatpush1.msra.mxu0 0.0
        %522 = vmatprep.subr.mxu0 0.0
        %523 = vmatpush1.msra.mxu0 0.0
        %524 = vmatprep.subr.mxu0 0.0
        %525 = vmatpush1.msra.mxu0 0.0
        %526 = vmatprep.subr.mxu0 0.0
        %527 = vmatpush1.msra.mxu0 0.0
        %528 = vmatprep.subr.mxu0 0.0
        %529 = vmatpush1.msra.mxu0 0.0
        %530 = vmatprep.mubr.f32.mxu0 0.0
        %531 = vmatmul.mubr.f32.gmra.mrb[0].mxu0 %v322
        %v532 = vpop.f32.mrb[0].mxu0
        %v533 = vadd.f32 %v318, %v532
        %v534 = vpop.f32.mrb[0].mxu0
        %v535 = vadd.f32 %v318, %v534
        %536 = vdwg.mxu0
        %537 = vmatprep.subr.mxu0 %v289
        %538 = vmatpush1.msra.mxu0 %v288
        %539 = vmatprep.subr.mxu0 %v297
        %540 = vmatpush1.msra.mxu0 %v296
        %541 = vmatprep.subr.mxu0 %v305
        %542 = vmatpush1.msra.mxu0 %v304
        %543 = vmatprep.subr.mxu0 %v313
        %544 = vmatpush1.msra.mxu0 %v312
        %545 = vmatprep.subr.mxu0 0.0
        %546 = vmatpush1.msra.mxu0 0.0
        %547 = vmatprep.subr.mxu0 0.0
        %548 = vmatpush1.msra.mxu0 0.0
        %549 = vmatprep.subr.mxu0 0.0
        %550 = vmatpush1.msra.mxu0 0.0
        %551 = vmatprep.subr.mxu0 0.0
        %552 = vmatpush1.msra.mxu0 0.0
        %553 = vmatprep.subr.mxu0 0.0
        %554 = vmatpush1.msra.mxu0 0.0
        %555 = vmatprep.subr.mxu0 0.0
        %556 = vmatpush1.msra.mxu0 0.0
        %557 = vmatprep.subr.mxu0 0.0
        %558 = vmatpush1.msra.mxu0 0.0
        %559 = vmatprep.subr.mxu0 0.0
        %560 = vmatpush1.msra.mxu0 0.0
        %561 = vmatprep.subr.mxu0 0.0
        %562 = vmatpush1.msra.mxu0 0.0
        %563 = vmatprep.subr.mxu0 0.0
        %564 = vmatpush1.msra.mxu0 0.0
        %565 = vmatprep.subr.mxu0 0.0
        %566 = vmatpush1.msra.mxu0 0.0
        %567 = vmatprep.subr.mxu0 0.0
        %568 = vmatpush1.msra.mxu0 0.0
        %569 = vmatprep.subr.mxu0 0.0
        %570 = vmatpush1.msra.mxu0 0.0
        %571 = vmatprep.subr.mxu0 0.0
        %572 = vmatpush1.msra.mxu0 0.0
        %573 = vmatprep.subr.mxu0 0.0
        %574 = vmatpush1.msra.mxu0 0.0
        %575 = vmatprep.subr.mxu0 0.0
        %576 = vmatpush1.msra.mxu0 0.0
        %577 = vmatprep.subr.mxu0 0.0
        %578 = vmatpush1.msra.mxu0 0.0
        %579 = vmatprep.subr.mxu0 0.0
        %580 = vmatpush1.msra.mxu0 0.0
        %581 = vmatprep.subr.mxu0 0.0
        %582 = vmatpush1.msra.mxu0 0.0
        %583 = vmatprep.subr.mxu0 0.0
        %584 = vmatpush1.msra.mxu0 0.0
        %585 = vmatprep.subr.mxu0 0.0
        %586 = vmatpush1.msra.mxu0 0.0
        %587 = vmatprep.subr.mxu0 0.0
        %588 = vmatpush1.msra.mxu0 0.0
        %589 = vmatprep.subr.mxu0 0.0
        %590 = vmatpush1.msra.mxu0 0.0
        %591 = vmatprep.subr.mxu0 0.0
        %592 = vmatpush1.msra.mxu0 0.0
        %593 = vmatprep.subr.mxu0 0.0
        %594 = vmatpush1.msra.mxu0 0.0
        %595 = vmatprep.subr.mxu0 0.0
        %596 = vmatpush1.msra.mxu0 0.0
        %597 = vmatprep.subr.mxu0 0.0
        %598 = vmatpush1.msra.mxu0 0.0
        %599 = vmatprep.subr.mxu0 0.0
        %600 = vmatpush1.msra.mxu0 0.0
        %601 = vmatprep.mubr.f32.mxu0 0.0
        %602 = vmatmul.mubr.f32.gmra.mrb[0].mxu0 %v322
        %v603 = vpop.f32.mrb[0].mxu0
        %v604 = vadd.f32 %v318, %v603
        %v605 = vpop.f32.mrb[0].mxu0
        %v606 = vadd.f32 %v318, %v605
        %607 = vdwg.mxu0
        %v616 = vcombine.low %v391, %v393
        %v617 = vcombine.low %v462, %v464
        %v618 = vcombine.low %v533, %v535
        %v619 = vcombine.low %v604, %v606
        %624 = vst [vmem:[%s279] sm:$0xff] %v616
        %625 = vst [vmem:[%s279 + $0x8] sm:$0xff] %v617
        %626 = vst [vmem:[%s279 + $0x10] sm:$0xff] %v618
        %627 = vst [vmem:[%s279 + $0x18] sm:$0xff] %v619
        %s628 = smul.u32 8, %s19
        %p629 = scmp.lt.s32.totalorder %s18, 1
        %s630 = scalar_select %p629, %s18, 1
        %p631 = scmp.lt.s32.totalorder %s628, 31
        %s632 = scalar_select %p631, %s628, 31
        %s633 = smul.addr %s630, 32
        %s634 = sadd.s32 %s632, %s633
        %s635 = smul.addr %s634, 4
        %s636 = scalar_lea.vmem %s3, %s635
        // Predicated region
        $region56: #{out_block_forward.1} parent=50 // pred_check
          %p637 = pneg %p116
        $region57: #{out_block_forward.1} parent=50 // pred_check_branch
          %639 = sbr.rel (%p637) target = $region59
        $region58: #{out_block_forward.1} parent=50 // pred_region
          %s640 = smul.u32 8, %s19
        $region59: #{out_block_forward.1} parent=50 // pred_fallthru
          _
      $region51: #{out_block_forward.1} parent=5 // pred_fallthru
        _
      %p641 = scmp.le.s32.totalorder 2, %s9
      // Predicated region
      $region60: #{out_block_forward.1} parent=5 // pred_check
        %p642 = pneg %p641
      $region61: #{out_block_forward.1} parent=5 // pred_check_branch
        %644 = sbr.rel (%p642) target = $region63
      $region62: #{out_block_forward.1} parent=5 // pred_region
        %s645 = ssub.s32 %s9, 2
        // Predicated region
        $region64: #{out_block_forward.1} parent=62 // pred_check
          %p646 = pneg %p122
        $region65: #{out_block_forward.1} parent=62 // pred_check_branch
          %648 = sbr.rel (%p646) target = $region67
        $region66: #{out_block_forward.1} parent=62 // pred_region
          %s649 = smul.u32 8, %s21
          %p650 = scmp.lt.s32.totalorder %s20, 1
          %s651 = scalar_select %p650, %s20, 1
          %p652 = scmp.lt.s32.totalorder %s649, 31
          %s653 = scalar_select %p652, %s649, 31
          %s654 = smul.addr %s651, 32
          %s655 = sadd.s32 %s653, %s654
          %s656 = smul.addr %s655, 4
          %s657 = scalar_lea.vmem %s3, %s656
        $region67: #{out_block_forward.1} parent=62 // pred_fallthru
          _
      $region63: #{out_block_forward.1} parent=5 // pred_fallthru
        _
    $region6: #{out_block_forward.1} parent=1 // loop_footer
      %s13 = sadd.s32 1, %s9
    $region7: #{out_block_forward.1} parent=1 // loop_footer_branch
      %8 = sbr.rel target = $region3
    $region8: #{out_block_forward.1} parent=1 // loop_exit
      _

</llo_original>
